<compile_context>
chip_gen: v7x
topology: tpu7x:2x2x1
jax: 0.10.0
libtpu: 0.0.40
codegen_flags: <defaults>
</compile_context>

<pallas_src>
import functools
import math

import jax
import jax.numpy as jnp
from jax import lax
from jax.experimental import pallas as pl
from jax.experimental.pallas import tpu as pltpu

_LANE = 128


def _pe_kernel(div_ref, off_ref, o_ref, *, ppr: int, tm_rows: int):
    """Writes one (tm_rows, W) tile of the flattened PE table.

    div_ref, off_ref are (1, W) position-invariant lane rows:
      div_ref[0, l] = exp(-ln(10000) * 2*floor(d/2) / d_model)
      off_ref[0, l] = lane_pos(l) * div_ref[0, l] + (pi/2 if d odd else 0)
    with flat lane index l = lane_pos * d_model + d (ppr positions per row).
    """
    r0 = pl.program_id(0) * tm_rows
    row = lax.broadcasted_iota(jnp.int32, (tm_rows, 1), 0) + r0
    rowpos = (row * ppr).astype(jnp.float32)              # (tm, 1) cheap column
    angle = rowpos * div_ref[...] + off_ref[...]          # (tm, W): 1 mul + 1 add
    o_ref[...] = jnp.sin(angle).astype(o_ref.dtype)       # 1 EUP sin / element


def _choose_layout(d_model: int, max_len: int):
    """Pick a lane-dense 2D (rows, W, ppr) layout for the flattened table."""
    total = max_len * d_model
    if d_model % _LANE == 0:
        return max_len, d_model, 1                       # naturally lane-dense
    w = (d_model * _LANE) // math.gcd(d_model, _LANE)    # lcm(d_model, 128)
    if total % w == 0:
        return total // w, w, w // d_model               # flattened lane-dense slab
    return max_len, d_model, 1                           # fallback: masked stores


def _default_tile_cap_bytes() -> int:
    try:
        vmem = pltpu.get_tpu_info().vmem_capacity_bytes
    except Exception:
        vmem = None
    if vmem is None:
        return 4 << 20
    # v7x has only 64 MiB VMEM per TensorCore: keep tiles modest there
    # (double-buffered output + broadcast temps). v5e/v6e (128 MiB): bigger
    # tiles amortize the per-grid-step overhead on this write-bound kernel.
    return (2 << 20) if vmem <= (64 << 20) else (8 << 20)


def dynamic_positional_encoding(d_model: int, max_len: int = 512,
                                dtype=jnp.float32, max_tile_bytes=None):
    """Returns pe of shape (1, max_len, d_model) — same as module.forward()."""
    scale = -math.log(10000.0) / d_model
    total = max_len * d_model
    itemsize = jnp.dtype(dtype).itemsize

    rows, W, ppr = _choose_layout(d_model, max_len)

    # Position-invariant per-lane rows, computed once (tiny XLA op) outside
    # the kernel; removes all int mod/div, exp and casts from the hot loop.
    lane = jnp.arange(W, dtype=jnp.int32)
    if ppr == 1:
        d = lane
        lane_pos = jnp.zeros_like(lane)
    else:
        d = lane % d_model
        lane_pos = lane // d_model
    odd = d % 2
    two_i = (d - odd).astype(jnp.float32)
    div_row = jnp.exp(two_i * jnp.float32(scale))[None, :]               # (1, W)
    off_row = (lane_pos.astype(jnp.float32) * div_row[0]
               + odd.astype(jnp.float32) * jnp.float32(math.pi / 2.0))[None, :]

    # ---- tile the row axis ----
    align = max(8, 32 // itemsize)                       # 8 for f32, 16 for bf16
    cap = max_tile_bytes if max_tile_bytes is not None else _default_tile_cap_bytes()
    row_bytes = W * itemsize
    max_rows = max(align, (cap // row_bytes) // align * align)
    tm = rows if rows <= max_rows else max_rows

    total_bytes = rows * W * itemsize
    if total_bytes > (256 << 10) and tm >= rows:
        # Force >= 2 grid steps: shards across v7x's 2 TensorCores and lets
        # HBM writeback of tile i-1 overlap compute of tile i.
        cand = -(-((rows + 1) // 2) // align) * align
        if cand < rows:
            tm = cand
    grid = (pl.cdiv(rows, tm),)

    tile_bytes = tm * W * itemsize
    vmem_limit = min(64 << 20, max(32 << 20, 5 * tile_bytes))

    kernel = functools.partial(_pe_kernel, ppr=ppr, tm_rows=tm)
    row_spec = pl.BlockSpec((1, W), lambda i: (0, 0))

    out2d = pl.pallas_call(
        kernel,
        out_shape=jax.ShapeDtypeStruct((rows, W), dtype),
        grid=grid,
        in_specs=[row_spec, row_spec],
        out_specs=pl.BlockSpec((tm, W), lambda i: (i, 0)),
        compiler_params=pltpu.CompilerParams(
            dimension_semantics=("parallel",),   # independent tiles -> 2 TCs on v7x
            vmem_limit_bytes=vmem_limit,
        ),
        cost_estimate=pl.CostEstimate(
            flops=3 * total,                     # mul + add + cast per element
            transcendentals=total,               # one sin per element
            bytes_accessed=total * itemsize + 2 * W * 4,
        ),
    )(div_row, off_row)

    # Free layout plumbing in the wrapper (row-major compatible).
    return out2d.reshape(1, max_len, d_model)


def _reference_pe(d_model: int, max_len: int) -> jax.Array:
    # Pure-JAX reference mirroring the PyTorch __init__.
    position = jnp.arange(max_len, dtype=jnp.float32)[:, None]
    div_term = jnp.exp(
        jnp.arange(0, d_model, 2, dtype=jnp.float32) * (-math.log(10000.0) / d_model)
    )
    pe = jnp.zeros((max_len, d_model), jnp.float32)
    pe = pe.at[:, 0::2].set(jnp.sin(position * div_term))
    pe = pe.at[:, 1::2].set(jnp.cos(position * div_term))
    return pe[None]


if __name__ == "__main__":
    # forward() takes no tensor inputs; key kept only for the deterministic-setup
    # convention (unused by the math).
    _ = jax.random.PRNGKey(0)

    # (d_model, max_len, dtype, max_tile_bytes_override)
    configs = [
        (32, 8, jnp.float32, None),      # demo config -> flattened slab, W=128
        (128, 64, jnp.float32, None),    # d_model multiple of 128 -> naturally lane-dense
        (48, 16, jnp.float32, None),     # lcm flattening: W=384, ppr=8
        (96, 40, jnp.float32, 12288),    # forces 2 grid steps + uneven (partial) last tile
        (48, 5, jnp.float32, None),      # fallback path (last dim = d_model, masked stores)
        (32, 512, jnp.float32, None),    # module-default max_len
        (32, 16, jnp.bfloat16, None),    # bf16 output variant
    ]
    for d_model, max_len, dtype, cap in configs:
        out = dynamic_positional_encoding(d_model, max_len=max_len, dtype=dtype,
                                          max_tile_bytes=cap)
        out = jax.block_until_ready(out)
        ref = _reference_pe(d_model, max_len)
        assert out.shape == (1, max_len, d_model), (d_model, max_len)
        assert out.dtype == dtype, (d_model, max_len)
        if dtype == jnp.bfloat16:
            ok = jnp.allclose(out.astype(jnp.float32), ref, atol=1e-2, rtol=1e-2)
        else:
            # cos as sin(x + pi/2): abs error ~ eps * |angle|, |angle| <= max_len.
            atol = max(3e-5, 2.5e-7 * max_len)
            ok = jnp.allclose(out, ref, atol=atol, rtol=1e-5)
        assert ok, (d_model, max_len, str(dtype))

    print("KERNEL_OK")
</pallas_src>

<mosaic_0001>
module attributes {stable_mosaic.version = 11 : i64} {
  func.func @_pe_kernel(%arg0: i32, %arg1: memref<1x128xf32, #tpu.memory_space<vmem>>, %arg2: memref<1x128xf32, #tpu.memory_space<vmem>>, %arg3: memref<2x128xf32, #tpu.memory_space<vmem>>) attributes {dimension_semantics = [#tpu.dimension_semantics<parallel>], iteration_bounds = array<i64: 1>, scalar_prefetch = 0 : i64, scratch_operands = 0 : i64, tpu.core_type = #tpu.core_type<tc>, window_params = [{pipeline_mode = #tpu.pipeline_mode<synchronous>, transform_indices = @transform_0, window_bounds = array<i64: 1, 128>}, {pipeline_mode = #tpu.pipeline_mode<synchronous>, transform_indices = @transform_1, window_bounds = array<i64: 1, 128>}, {transform_indices = @transform_2, window_bounds = array<i64: 2, 128>}]} {
    %c2_i32 = arith.constant 2 : i32
    %0 = arith.muli %arg0, %c2_i32 : i32
    %1 = tpu.iota {dimensions = array<i32: 0>} : vector<2x1xi32>
    %2 = vector.broadcast %0 : i32 to vector<2x1xi32>
    %3 = arith.addi %1, %2 : vector<2x1xi32>
    %c4_i32 = arith.constant 4 : i32
    %4 = vector.broadcast %c4_i32 : i32 to vector<2x1xi32>
    %5 = arith.muli %3, %4 : vector<2x1xi32>
    %6 = arith.sitofp %5 : vector<2x1xi32> to vector<2x1xf32>
    %c0 = arith.constant 0 : index
    %c0_0 = arith.constant 0 : index
    %7 = vector.load %arg1[%c0, %c0_0] : memref<1x128xf32, #tpu.memory_space<vmem>>, vector<1x128xf32>
    %8 = vector.broadcast %6 : vector<2x1xf32> to vector<2x128xf32>
    %9 = vector.broadcast %7 : vector<1x128xf32> to vector<2x128xf32>
    %10 = arith.mulf %8, %9 : vector<2x128xf32>
    %c0_1 = arith.constant 0 : index
    %c0_2 = arith.constant 0 : index
    %11 = vector.load %arg2[%c0_1, %c0_2] : memref<1x128xf32, #tpu.memory_space<vmem>>, vector<1x128xf32>
    %12 = vector.broadcast %11 : vector<1x128xf32> to vector<2x128xf32>
    %13 = arith.addf %10, %12 : vector<2x128xf32>
    %14 = math.sin %13 : vector<2x128xf32>
    %c0_3 = arith.constant 0 : index
    %c0_4 = arith.constant 0 : index
    %15 = vector.load %arg3[%c0_3, %c0_4] : memref<2x128xf32, #tpu.memory_space<vmem>>, vector<2x128xf32>
    tpu.vector_store %arg3[%c0_3, %c0_4], %14 {strides = array<i32>} : memref<2x128xf32, #tpu.memory_space<vmem>>, vector<2x128xf32>,
    return
  }
  func.func @transform_0(%arg0: i32) -> (i32, i32) {
    %c0_i32 = arith.constant 0 : i32
    %c0_i32_0 = arith.constant 0 : i32
    %c0_i32_1 = arith.constant 0 : i32
    return %c0_i32, %c0_i32_0 : i32, i32
  }
  func.func @transform_1(%arg0: i32) -> (i32, i32) {
    %c0_i32 = arith.constant 0 : i32
    %c0_i32_0 = arith.constant 0 : i32
    %c0_i32_1 = arith.constant 0 : i32
    return %c0_i32, %c0_i32_0 : i32, i32
  }
  func.func @transform_2(%arg0: i32) -> (i32, i32) {
    %c0_i32 = arith.constant 0 : i32
    %c0_i32_0 = arith.constant 0 : i32
    return %arg0, %c0_i32 : i32, i32
  }
}

</mosaic_0001>

<llo_original>
// kernel: tpu_custom_call.1
$region0: #{tpu_custom_call.1}
  #allocation0 [shape = 'u32[]', space=smem, size = 0x4, offset = 0x4, fixed_abs, tag = 'smem constant byte address 0x4 - core index']
  #allocation1 [shape = 'u32[144,128]{1,0:T(1,128)}', space=vmem, size = 0x12000, scoped, tag = 'internal scratch']
  %s0 = inlined_call_operand.hbm [shape: f32[1,128], index: 0, kind: input, shape index: {}]
  %s1 = inlined_call_operand.vmem [shape: f32[1,128], index: 1, kind: input, shape index: {}]
  %s2 = inlined_call_operand.hbm [shape: f32[2,128], index: 2, kind: output, shape index: {}]
  %s3 = sld [smem:[#allocation0]]
  $region22: #{tpu_custom_call.1} parent=0
    _
  %s5 = ssub.s32 1, %s3
  %s6 = scalar_select 0, %s5, %s3
  $region1: #{tpu_custom_call.1} parent=0
    #allocation2 [shape = 'u8[512]{0}', space=vmem, size = 0x400, scoped, tag = 'input window, operand 0, single buffered']
    #allocation3 [shape = 's32[1]{0}', space=sflag, size = 0x4, scoped, tag = 'scoped memory for tpu_custom_call.1']
    #allocation4 [shape = 's32[1]{0}', space=sflag, size = 0x4, scoped, tag = 'scoped memory for tpu_custom_call.1']
    #allocation5 [shape = 'u8[1024]{0}', space=vmem, size = 0x400, scoped, tag = 'output window, operand 0, single buffered']
    %7 = vsyncpa [#allocation3], 0
    %8 = vsyncpa [#allocation4], 0
    // Predicated region
    $region2: #{tpu_custom_call.1} parent=1 // pred_check
      _
    $region3: #{tpu_custom_call.1} parent=1 // pred_check_branch
      %10 = sbr.rel (0) target = $region5
    $region4: #{tpu_custom_call.1} parent=1 // pred_region
      %s12 = ssub.s32 16, 16
      %13 = vsyncadd [#allocation3], %s12
      %s15 = sshll.u32 [#allocation2], 4
      %s16 = int_to_ptr.vmem [resolvable:$true] %s15
      %18 = dma.hbm_to_vmem [thread:$0]  %s0, 16, %s16, [#allocation3]
    $region5: #{tpu_custom_call.1} parent=1 // pred_fallthru
      _
    // Predicated region
    $region6: #{tpu_custom_call.1} parent=1 // pred_check
      _
    $region7: #{tpu_custom_call.1} parent=1 // pred_check_branch
      %20 = sbr.rel (0) target = $region9
    $region8: #{tpu_custom_call.1} parent=1 // pred_region
      _
    $region9: #{tpu_custom_call.1} parent=1 // pred_fallthru
      _
    // Predicated region
    $region10: #{tpu_custom_call.1} parent=1 // pred_check
      _
    $region11: #{tpu_custom_call.1} parent=1 // pred_check_branch
      %22 = sbr.rel (0) target = $region13
    $region12: #{tpu_custom_call.1} parent=1 // pred_region
      %23 = dma.done [#allocation3], 16
    $region13: #{tpu_custom_call.1} parent=1 // pred_fallthru
      _
    %s24 = smul.u32 0, 2
    %v25 = vlaneseq
    %v26 = vshrl.u32 %v25, 7
    %v27 = vstv %s24
    %v28 = vadd.s32 %v26, %v27
    %v29 = vmul.u32 %v28, 4
    %v30 = vcvt.s32.f32 %v29
    %v31 = vld [vmem:[#allocation2] sm:$0x1]
    %v33 = vlaneseq
    %v34 = vshrl.u32 %v33, 7
    %v35 = vsub.s32 0, %v34
    %v36 = vrot.slane %v31, %v35
    %v38 = vmul.f32 %v30, %v36
    %v39 = vld [vmem:[%s1] sm:$0x1]
    %v41 = vlaneseq
    %v42 = vshrl.u32 %v41, 7
    %v43 = vsub.s32 0, %v42
    %v44 = vrot.slane %v39, %v43
    %v46 = vadd.f32 %v38, %v44
    %v47 = vand.u32 2147483647, %v46
    %vm48 = vcmp.le.f32.partialorder %v47, 0.7853982
    %vm49 = vcmp.lt.s32.totalorder %v46, 0
    %v50 = vand.u32 %v46, 2139095040
    %v51 = vshrl.u32 %v50, 23
    %v52 = vsub.s32 %v51, 127
    %v53 = vand.u32 2147483647, %v46
    %v54 = vand.u32 %v53, 8388607
    %v55 = vor.u32 %v54, 8388608
    %v56 = vsub.s32 0, %v55
    %v57 = vadd.s32 %v52, 1
    %vm58 = vcmp.gt.s32.totalorder %v57, 0
    %v59 = vsel %vm58, %v57, 0
    %v60 = vshrl.u32 %v59, 5
    %v61 = vand.u32 %v59, 31
    %v62 = vsub.s32 32, %v61
    %v63 = vshrl.u32 683565275, %v62
    %v64 = vshll.u32 683565275, %v61
    %v65 = vshrl.u32 2475754826, %v62
    %v66 = vor.u32 %v64, %v65
    %v67 = vshll.u32 2475754826, %v61
    %v68 = vshrl.u32 2131351028, %v62
    %v69 = vor.u32 %v67, %v68
    %v70 = vshll.u32 2131351028, %v61
    %v71 = vshrl.u32 2102212464, %v62
    %v72 = vor.u32 %v70, %v71
    %v73 = vshll.u32 2102212464, %v61
    %v74 = vshrl.u32 920167782, %v62
    %v75 = vor.u32 %v73, %v74
    %v76 = vshll.u32 920167782, %v61
    %v77 = vshrl.u32 1326507024, %v62
    %v78 = vor.u32 %v76, %v77
    %vm79 = vcmp.lt.s32.totalorder %v60, 1
    %vm80 = vcmp.lt.s32.totalorder %v60, 2
    %vm81 = vcmp.lt.s32.totalorder %v60, 3
    %vm82 = vcmp.lt.s32.totalorder %v60, 4
    %v83 = vsel %vm79, %v63, %v66
    %v84 = vsel %vm82, %v72, 2102212464
    %v85 = vsel %vm81, %v69, %v84
    %v86 = vsel %vm80, %v83, %v85
    %v87 = vsel %vm79, %v66, %v69
    %v88 = vsel %vm82, %v75, 920167782
    %v89 = vsel %vm81, %v72, %v88
    %v90 = vsel %vm80, %v87, %v89
    %v91 = vsel %vm79, %v69, %v72
    %v92 = vsel %vm82, %v78, 1326507024
    %v93 = vsel %vm81, %v75, %v92
    %v94 = vsel %vm80, %v91, %v93
    %v95 = vshll.u32 %v55, 8
    %v96 = vmul.u32.u64.compose %v95, %v94
    %v97 = vextract.low.u32 %v96
    %v98 = vextract.high.u32 %v96
    %v99 = vmul.u32.u64.compose %v95, %v90
    %v100 = vextract.low.u32 %v99
    %v101 = vextract.high.u32 %v99
    %v102 = vmul.u32 %v95, %v86
    %v103 = vadd.s32 %v98, %v100
    %vm104 = vc.u32 %v98, %v100
    %v105 = vadd.s32 %v101, 1
    %v106 = vsel %vm104, %v105, %v101
    %v107 = vadd.s32 %v102, %v106
    %v108 = vadd.s32 %v107, 536870912
    %v109 = vshrl.u32 %v108, 30
    %v110 = vshll.u32 %v109, 30
    %v111 = vsub.s32 %v107, %v110
    %vm112 = vcmp.lt.s32.totalorder %v111, 0
    %v113 = vsub.s32 0, %v111
    %v114 = vsel %vm112, %v113, %v111
    %v115 = vclz %v114
    %v116 = vsub.s32 %v115, 2
    %vm117 = vcmp.gt.s32.totalorder 0, %v116
    %v118 = vsel %vm117, 0, %v116
    %v119 = vsub.s32 32, %v118
    %v120 = vshll.u32 %v111, %v118
    %v121 = vshrl.u32 %v103, %v119
    %v122 = vor.u32 %v120, %v121
    %v123 = vsub.s32 4294967266, %v118
    %v124 = vadd.s32 %v123, 127
    %v125 = vshll.u32 %v124, 23
    %v126 = vor.u32 4788187, %v125
    %v127 = vand.u32 2147483647, %v126
    %v129 = vcvt.s32.f32 %v122
    %v130 = vmul.f32 %v129, %v127
    %v131 = vxor.u32 %v130, 2147483648
    %v132 = vsel %vm49, %v131, %v130
    %v133 = vsub.s32 4, %v109
    %v134 = vsel %vm49, %v133, %v109
    %v135 = vsel %vm48, %v46, %v132
    %v136 = vsel %vm48, 0, %v134
    %v137 = vcosq.f32.pop %v135
    %v138 = vsinq.f32.pop %v135
    %vm139 = vweird.f32 %v46
    %v140 = vadd.s32 %v136, 3
    %v141 = vand.u32 %v140, 3
    %vm142 = vcmp.lt.s32.totalorder %v141, 2
    %vm143 = vcmp.eq.s32.totalorder %v141, 0
    %v144 = vxor.u32 %v138, 2147483648
    %v145 = vsel %vm143, %v137, %v144
    %vm146 = vcmp.eq.s32.totalorder %v141, 2
    %v147 = vxor.u32 %v137, 2147483648
    %v148 = vsel %vm146, %v147, %v138
    %v149 = vsel %vm142, %v145, %v148
    %v150 = vsel %vm139, nan, %v149
    %151 = vst [vmem:[#allocation5] sm:$0x3] %v150
    // Predicated region
    $region14: #{tpu_custom_call.1} parent=1 // pred_check
      _
    $region15: #{tpu_custom_call.1} parent=1 // pred_check_branch
      %153 = sbr.rel (0) target = $region17
    $region16: #{tpu_custom_call.1} parent=1 // pred_region
      %s155 = ssub.s32 32, 32
      %156 = vsyncadd [#allocation4], %s155
      %s158 = sshll.u32 [#allocation5], 4
      %s159 = int_to_ptr.vmem [resolvable:$true] %s158
      %161 = dma.vmem_to_hbm [thread:$0]  %s159, 32, %s2, [#allocation4]
    $region17: #{tpu_custom_call.1} parent=1 // pred_fallthru
      _
    // Predicated region
    $region18: #{tpu_custom_call.1} parent=1 // pred_check
      _
    $region19: #{tpu_custom_call.1} parent=1 // pred_check_branch
      %163 = sbr.rel (0) target = $region21
    $region20: #{tpu_custom_call.1} parent=1 // pred_region
      %164 = dma.done [#allocation4], 32
    $region21: #{tpu_custom_call.1} parent=1 // pred_fallthru
      _
    %165 = vsyncpa [#allocation3], 1
    %166 = vsyncpa [#allocation4], 1

</llo_original>
